<compile_context>
chip_gen: v6e
topology: v6e:2x2x1
jax: 0.10.0
libtpu: 0.0.40
codegen_flags: <defaults>
</compile_context>

<pallas_src>
import functools

import jax
import jax.numpy as jnp
from jax.experimental import pallas as pl
from jax.experimental.pallas import tpu as pltpu


def se_kernel(x_ref, w1t_ref, w2t_ref, o_ref, *, inv_hw):
    # x_ref: (TB, C, HWp)   w1t_ref: (C, hidden)   w2t_ref: (hidden, C)
    # Squeeze: f32-accumulating reduction over the (lane) spatial axis.  Padded
    # spatial columns are zeros, so dividing by the TRUE HW gives the exact mean
    # without materializing a full-tile f32 copy of x.
    pooled = jnp.sum(x_ref[...], axis=-1, dtype=jnp.float32) * inv_hw      # (TB, C)
    # Linear(C -> C//r, bias=False) + ReLU (weights pre-transposed host-side).
    h = jnp.dot(pooled, w1t_ref[...], preferred_element_type=jnp.float32)  # (TB, hid)
    h = jnp.maximum(h, 0.0)
    # Linear(C//r -> C, bias=False) + hsigmoid: relu6(s + 3) / 6, once per (b, c).
    s = jnp.dot(h, w2t_ref[...], preferred_element_type=jnp.float32)       # (TB, C)
    s = jnp.clip(s + 3.0, 0.0, 6.0) * (1.0 / 6.0)
    # Excite: re-read x from the VMEM ref (nothing multi-MiB held live across the
    # matmuls) and broadcast the per-channel scale over the spatial axis.
    o_ref[...] = (x_ref[...] * s[:, :, None].astype(x_ref.dtype)).astype(o_ref.dtype)


def _tpu_vmem_capacity_bytes():
    try:
        return int(pltpu.get_tpu_info().vmem_capacity_bytes)
    except Exception:
        return 64 << 20  # conservative default: assume the smallest (v7x-class) VMEM


def _pick_tb(B, per_b_bytes, target_tile_bytes, vmem_budget_bytes):
    """Largest batch-tile TB whose input tile stays <= target and whose
    double-buffered in+out tiles (4x tile) fit the VMEM budget."""
    tb = 1
    for d in range(1, B + 1):
        tile = d * per_b_bytes
        if 4 * tile > vmem_budget_bytes or tile > target_tile_bytes:
            break
        tb = d
    return tb


def se_module(x, w1, w2):
    """x: (B, C, H, W); w1: (C//r, C); w2: (C, C//r)  (PyTorch nn.Linear layout).
    Returns x * hsigmoid(relu(mean_{H,W}(x) @ w1.T) @ w2.T)."""
    B, C, H, W = x.shape
    HW = H * W
    hidden = w1.shape[0]
    itemsize = jnp.dtype(x.dtype).itemsize

    # ---- generation-aware budgets ------------------------------------------
    vmem_cap = _tpu_vmem_capacity_bytes()
    small_vmem = vmem_cap <= (96 << 20)   # v7x-class: 64 MiB per TC, 2 TCs/chip
    if small_vmem:
        target_tile_bytes = 4 << 20       # amortize ~0.35us/step at ~3.2 TB/s
        vmem_budget_bytes = 40 << 20
        vmem_cap_limit = 48 << 20         # never request the full 64 MiB
        two_tensorcores = True
    else:                                  # v5e / v6e: 128 MiB VMEM, single TC
        target_tile_bytes = 6 << 20
        vmem_budget_bytes = 96 << 20
        vmem_cap_limit = 100 << 20
        two_tensorcores = False

    # ---- lane-dense spatial axis -------------------------------------------
    # Pad H*W up to a multiple of 128 so loads/stores are unmasked full-lane
    # vld/vst and DMA rows are dense.  Padded columns are zeros; the in-kernel
    # pool divides by the TRUE HW, and padded output columns are sliced off.
    HWp = -(-HW // 128) * 128
    x_flat = x.reshape(B, C, HW)
    if HWp != HW:
        x_flat = jnp.pad(x_flat, ((0, 0), (0, 0), (0, HWp - HW)))

    # Pre-transposed weights so the kernel never pays an XLU transpose.
    # NOTE: under jit this is an XLA transpose per call; precompute outside if
    # the weights are static.
    w1t = jnp.asarray(w1).T               # (C, hidden)
    w2t = jnp.asarray(w2).T               # (hidden, C)

    # ---- batch tiling --------------------------------------------------------
    per_b = C * HWp * itemsize
    tb = _pick_tb(B, per_b, target_tile_bytes, vmem_budget_bytes)
    n_steps = -(-B // tb)
    if two_tensorcores and B >= 2:
        # Prefer an EVEN grid so dimension_semantics=("parallel",) keeps both
        # v7x TensorCores busy.  On single-TC parts (v5e/v6e) the grid is a
        # serial loop, so we do NOT force a split there for tiny problems.
        if n_steps == 1:
            n_steps = 2
        elif n_steps % 2 == 1:
            n_steps += 1
        tb = -(-B // n_steps)
    # Pad the batch so the grid covers a whole number of tiles: no ragged
    # trailing batch can ever be silently dropped.
    Bp = n_steps * tb
    assert Bp >= B and Bp % tb == 0 and Bp // tb == n_steps
    if Bp != B:
        x_flat = jnp.pad(x_flat, ((0, Bp - B), (0, 0), (0, 0)))

    # ---- VMEM budget: double-buffered in+out tiles + resident weights -------
    tile_bytes = tb * per_b
    weight_bytes = 2 * C * hidden * jnp.dtype(w1.dtype).itemsize
    # Weights use the default 2 pipeline buffers (the constant index_map leaves
    # the second buffer idle; pl.Buffered(1) would reclaim it, but we keep the
    # default for maximum lowering compatibility) -> count them twice.
    vmem_needed = 4 * tile_bytes + 2 * weight_bytes + (2 << 20)
    vmem_limit = int(min(max(vmem_needed, 16 << 20), vmem_cap_limit))

    kernel = functools.partial(se_kernel, inv_hw=float(1.0 / HW))
    out_flat = pl.pallas_call(
        kernel,
        out_shape=jax.ShapeDtypeStruct((Bp, C, HWp), x.dtype),
        grid_spec=pltpu.PrefetchScalarGridSpec(
            num_scalar_prefetch=0,
            grid=(n_steps,),
            in_specs=[
                pl.BlockSpec((tb, C, HWp), lambda b: (b, 0, 0)),
                # Constant index_map -> weights stay resident across grid steps.
                pl.BlockSpec((C, hidden), lambda b: (0, 0)),
                pl.BlockSpec((hidden, C), lambda b: (0, 0)),
            ],
            out_specs=pl.BlockSpec((tb, C, HWp), lambda b: (b, 0, 0)),
        ),
        compiler_params=pltpu.CompilerParams(
            dimension_semantics=("parallel",),
            vmem_limit_bytes=vmem_limit,
        ),
    )(x_flat, w1t, w2t)

    return out_flat[:B, :, :HW].reshape(B, C, H, W)


def reference_se(x, w1, w2):
    # Pure-JAX reference mirroring the PyTorch forward pass.
    pooled = jnp.mean(x, axis=(2, 3))                       # (B, C)
    h = jnp.maximum(pooled @ w1.T, 0.0)                     # (B, C//r)
    s = h @ w2.T                                            # (B, C)
    s = jnp.clip(s + 3.0, 0.0, 6.0) / 6.0                   # hsigmoid
    return x * s[:, :, None, None]


if __name__ == "__main__":
    key = jax.random.PRNGKey(0)
    B, C, H, W = 4, 16, 16, 16
    reduction = 4
    hidden = C // reduction

    kx, k1, k2 = jax.random.split(key, 3)
    x = jax.random.normal(kx, (B, C, H, W), dtype=jnp.float32)
    # PyTorch Linear stores weights as (out_features, in_features).
    w1 = jax.random.normal(k1, (hidden, C), dtype=jnp.float32) * (1.0 / jnp.sqrt(C))
    w2 = jax.random.normal(k2, (C, hidden), dtype=jnp.float32) * (1.0 / jnp.sqrt(hidden))

    out = se_module(x, w1, w2)
    jax.block_until_ready(out)

    ref = reference_se(x, w1, w2)
    assert out.shape == (B, C, H, W)
    assert jnp.allclose(out, ref, atol=1e-5, rtol=1e-5), "mismatch vs reference"
    print("KERNEL_OK")
</pallas_src>

<mosaic_0001>
module attributes {stable_mosaic.version = 11 : i64} {
  func.func @se_kernel(%arg0: i32, %arg1: memref<2x16x256xf32, #tpu.memory_space<vmem>>, %arg2: memref<16x4xf32, #tpu.memory_space<vmem>>, %arg3: memref<4x16xf32, #tpu.memory_space<vmem>>, %arg4: memref<2x16x256xf32, #tpu.memory_space<vmem>>) attributes {dimension_semantics = [#tpu.dimension_semantics<parallel>], iteration_bounds = array<i64: 2>, scalar_prefetch = 0 : i64, scratch_operands = 0 : i64, tpu.core_type = #tpu.core_type<tc>, window_params = [{transform_indices = @transform_0, window_bounds = array<i64: 2, 16, 256>}, {pipeline_mode = #tpu.pipeline_mode<synchronous>, transform_indices = @transform_1, window_bounds = array<i64: 16, 4>}, {pipeline_mode = #tpu.pipeline_mode<synchronous>, transform_indices = @transform_2, window_bounds = array<i64: 4, 16>}, {transform_indices = @transform_3, window_bounds = array<i64: 2, 16, 256>}]} {
    %c0 = arith.constant 0 : index
    %c0_0 = arith.constant 0 : index
    %c0_1 = arith.constant 0 : index
    %0 = vector.load %arg1[%c0, %c0_0, %c0_1] : memref<2x16x256xf32, #tpu.memory_space<vmem>>, vector<2x16x256xf32>
    %cst = arith.constant dense<0.000000e+00> : vector<2x16xf32>
    %1 = vector.multi_reduction <add>, %0, %cst [2] : vector<2x16x256xf32> to vector<2x16xf32>
    %cst_2 = arith.constant 3.906250e-03 : f32
    %2 = vector.broadcast %cst_2 : f32 to vector<2x16xf32>
    %3 = arith.mulf %1, %2 : vector<2x16xf32>
    %c0_3 = arith.constant 0 : index
    %c0_4 = arith.constant 0 : index
    %4 = vector.load %arg2[%c0_3, %c0_4] : memref<16x4xf32, #tpu.memory_space<vmem>>, vector<16x4xf32>
    %cst_5 = arith.constant dense<0.000000e+00> : vector<2x4xf32>
    %5 = tpu.matmul %3, %4, %cst_5 {dimension_numbers = #tpu.dot_dimension_numbers<[1], [0], [0], [1], [0, 0, 1, 1], [], []>} : vector<2x16xf32>, vector<16x4xf32>, vector<2x4xf32> -> vector<2x4xf32>
    %cst_6 = arith.constant 0.000000e+00 : f32
    %6 = vector.broadcast %cst_6 : f32 to vector<2x4xf32>
    %7 = arith.maximumf %5, %6 : vector<2x4xf32>
    %c0_7 = arith.constant 0 : index
    %c0_8 = arith.constant 0 : index
    %8 = vector.load %arg3[%c0_7, %c0_8] : memref<4x16xf32, #tpu.memory_space<vmem>>, vector<4x16xf32>
    %cst_9 = arith.constant dense<0.000000e+00> : vector<2x16xf32>
    %9 = tpu.matmul %7, %8, %cst_9 {dimension_numbers = #tpu.dot_dimension_numbers<[1], [0], [0], [1], [0, 0, 1, 1], [], []>} : vector<2x4xf32>, vector<4x16xf32>, vector<2x16xf32> -> vector<2x16xf32>
    %cst_10 = arith.constant 3.000000e+00 : f32
    %10 = vector.broadcast %cst_10 : f32 to vector<2x16xf32>
    %11 = arith.addf %9, %10 : vector<2x16xf32>
    %cst_11 = arith.constant 0.000000e+00 : f32
    %cst_12 = arith.constant 6.000000e+00 : f32
    %12 = vector.broadcast %cst_11 : f32 to vector<2x16xf32>
    %13 = arith.maximumf %12, %11 : vector<2x16xf32>
    %14 = vector.broadcast %cst_12 : f32 to vector<2x16xf32>
    %15 = arith.minimumf %14, %13 : vector<2x16xf32>
    %cst_13 = arith.constant 0.166666672 : f32
    %16 = vector.broadcast %cst_13 : f32 to vector<2x16xf32>
    %17 = arith.mulf %15, %16 : vector<2x16xf32>
    %c0_14 = arith.constant 0 : index
    %c0_15 = arith.constant 0 : index
    %c0_16 = arith.constant 0 : index
    %18 = vector.load %arg1[%c0_14, %c0_15, %c0_16] : memref<2x16x256xf32, #tpu.memory_space<vmem>>, vector<2x16x256xf32>
    %19 = vector.shape_cast %17 : vector<2x16xf32> to vector<2x16x1xf32>
    %20 = vector.broadcast %19 : vector<2x16x1xf32> to vector<2x16x256xf32>
    %21 = arith.mulf %18, %20 : vector<2x16x256xf32>
    %c0_17 = arith.constant 0 : index
    %c0_18 = arith.constant 0 : index
    %c0_19 = arith.constant 0 : index
    %22 = vector.load %arg4[%c0_17, %c0_18, %c0_19] : memref<2x16x256xf32, #tpu.memory_space<vmem>>, vector<2x16x256xf32>
    tpu.vector_store %arg4[%c0_17, %c0_18, %c0_19], %21 {strides = array<i32>} : memref<2x16x256xf32, #tpu.memory_space<vmem>>, vector<2x16x256xf32>,
    return
  }
  func.func @transform_0(%arg0: i32) -> (i32, i32, i32) {
    %c0_i32 = arith.constant 0 : i32
    %c0_i32_0 = arith.constant 0 : i32
    %c0_i32_1 = arith.constant 0 : i32
    return %arg0, %c0_i32, %c0_i32_0 : i32, i32, i32
  }
  func.func @transform_1(%arg0: i32) -> (i32, i32) {
    %c0_i32 = arith.constant 0 : i32
    %c0_i32_0 = arith.constant 0 : i32
    %c0_i32_1 = arith.constant 0 : i32
    return %c0_i32, %c0_i32_0 : i32, i32
  }
  func.func @transform_2(%arg0: i32) -> (i32, i32) {
    %c0_i32 = arith.constant 0 : i32
    %c0_i32_0 = arith.constant 0 : i32
    %c0_i32_1 = arith.constant 0 : i32
    return %c0_i32, %c0_i32_0 : i32, i32
  }
  func.func @transform_3(%arg0: i32) -> (i32, i32, i32) {
    %c0_i32 = arith.constant 0 : i32
    %c0_i32_0 = arith.constant 0 : i32
    %c0_i32_1 = arith.constant 0 : i32
    return %arg0, %c0_i32, %c0_i32_0 : i32, i32, i32
  }
}

</mosaic_0001>

<llo_original>
// kernel: tpu_custom_call.1
$region0: #{tpu_custom_call.1}
  #allocation0 [shape = 'u32[]', space=smem, size = 0x4, offset = 0x4, fixed_abs, tag = 'smem constant byte address 0x4 - core index']
  #allocation1 [shape = 'u32[144,128]{1,0:T(1,128)}', space=vmem, size = 0x12000, scoped, tag = 'internal scratch']
  %s0 = inlined_call_operand.hbm [shape: f32[4,16,256], index: 0, kind: input, shape index: {}]
  %s1 = inlined_call_operand.vmem [shape: f32[16,4], index: 1, kind: input, shape index: {}]
  %s2 = inlined_call_operand.vmem [shape: f32[4,16], index: 2, kind: input, shape index: {}]
  %s3 = inlined_call_operand.hbm [shape: f32[4,16,256], index: 3, kind: output, shape index: {}]
  %s4 = sld [smem:[#allocation0]]
  $region49: #{tpu_custom_call.1} parent=0
    _
  %s6 = ssub.s32 1, %s4
  %s7 = scalar_select 0, %s6, %s4
  $region1: #{tpu_custom_call.1} parent=0
    #allocation2 [shape = 'u8[65536]{0}', space=vmem, size = 0x10000, scoped, tag = 'input window, operand 0']
    #allocation3 [shape = 's32[2]{0}', space=sflag, size = 0x8, scoped, tag = 'scoped memory for tpu_custom_call.1']
    #allocation4 [shape = 's32[2]{0}', space=sflag, size = 0x8, scoped, tag = 'scoped memory for tpu_custom_call.1']
    #allocation5 [shape = 'u8[65536]{0}', space=vmem, size = 0x10000, scoped, tag = 'output window, operand 0']
    %8 = vsyncpa [#allocation3], 0
    %s9 = scalar_lea.sflag [#allocation3], 1
    %10 = vsyncpa %s9, 0
    %11 = vsyncpa [#allocation4], 0
    %s12 = scalar_lea.sflag [#allocation4], 1
    %13 = vsyncpa %s12, 0
    loop: start=0, step=1, limit=4
    $region2: #{tpu_custom_call.1} parent=1 // loop_pre_header
      _
    $region3: #{tpu_custom_call.1} parent=1 // loop_header
      %s15 = sphi 0, %s19
      %p16 = scmp.ge.s32.totalorder %s15, 4
      %s25 = sphi 0, %s27
      %s28 = sphi 0, %s25
      %s29 = sphi 0, %s28
      %s45 = sphi 0, %s29
      %s49 = sphi 0, %s49
      %s51 = sphi 0, %s49
      %s52 = sphi 0, %s51
      %s66 = sphi 0, %s52
      %s70 = sphi 0, %s70
      %s72 = sphi 0, %s70
      %s73 = sphi 0, %s72
      %s87 = sphi 0, %s73
      %s93 = sphi 0, %s95
      %s96 = sphi 0, %s93
      %s97 = sphi 0, %s96
      %s113 = sphi 0, %s97
    $region4: #{tpu_custom_call.1} parent=1 // loop_header_branch
      %18 = sbr.rel (%p16) target = $region8
    $region5: #{tpu_custom_call.1} parent=1 // loop_body
      %s20 = ssub.s32 %s15, 1
      %s21 = ssub.s32 %s15, 2
      %s22 = sadd.s32 %s15, 1
      %s23 = ssub.s32 %s15, %s22
      %p24 = scmp.eq.s32.totalorder %s23, 0
      %s26 = sadd.s32 %s25, 1
      %s27 = scalar_select %p24, %s25, %s26
      %p30 = pneg %p24
      %p31 = scmp.eq.s32.totalorder %s15, 1
      %p32 = por %p30, %p31
      %p33 = scmp.ne.s32.totalorder %s25, %s28
      %p34 = scmp.eq.s32.totalorder %s15, 0
      %p35 = por %p33, %p34
      %p36 = scmp.ne.s32.totalorder %s25, %s28
      %p37 = scmp.eq.s32.totalorder %s20, 1
      %p38 = por %p36, %p37
      %p39 = scmp.ne.s32.totalorder %s28, %s29
      %p40 = scmp.eq.s32.totalorder %s20, 0
      %p41 = por %p39, %p40
      %p42 = scmp.ne.s32.totalorder %s28, %s29
      %p43 = scmp.eq.s32.totalorder %s21, 1
      %p44 = por %p42, %p43
      %p46 = scmp.ne.s32.totalorder %s29, %s45
      %p47 = scmp.eq.s32.totalorder %s21, 0
      %p48 = por %p46, %p47
      %s50 = sadd.s32 %s49, 1
      %p53 = scmp.eq.s32.totalorder %s15, 1
      %p54 = scmp.ne.s32.totalorder %s49, %s51
      %p55 = scmp.eq.s32.totalorder %s15, 0
      %p56 = por %p54, %p55
      %p57 = scmp.ne.s32.totalorder %s49, %s51
      %p58 = scmp.eq.s32.totalorder %s20, 1
      %p59 = por %p57, %p58
      %p60 = scmp.ne.s32.totalorder %s51, %s52
      %p61 = scmp.eq.s32.totalorder %s20, 0
      %p62 = por %p60, %p61
      %p63 = scmp.ne.s32.totalorder %s51, %s52
      %p64 = scmp.eq.s32.totalorder %s21, 1
      %p65 = por %p63, %p64
      %p67 = scmp.ne.s32.totalorder %s52, %s66
      %p68 = scmp.eq.s32.totalorder %s21, 0
      %p69 = por %p67, %p68
      %s71 = sadd.s32 %s70, 1
      %p74 = scmp.eq.s32.totalorder %s15, 1
      %p75 = scmp.ne.s32.totalorder %s70, %s72
      %p76 = scmp.eq.s32.totalorder %s15, 0
      %p77 = por %p75, %p76
      %p78 = scmp.ne.s32.totalorder %s70, %s72
      %p79 = scmp.eq.s32.totalorder %s20, 1
      %p80 = por %p78, %p79
      %p81 = scmp.ne.s32.totalorder %s72, %s73
      %p82 = scmp.eq.s32.totalorder %s20, 0
      %p83 = por %p81, %p82
      %p84 = scmp.ne.s32.totalorder %s72, %s73
      %p85 = scmp.eq.s32.totalorder %s21, 1
      %p86 = por %p84, %p85
      %p88 = scmp.ne.s32.totalorder %s73, %s87
      %p89 = scmp.eq.s32.totalorder %s21, 0
      %p90 = por %p88, %p89
      %s91 = ssub.s32 %s15, %s22
      %p92 = scmp.eq.s32.totalorder %s91, 0
      %s94 = sadd.s32 %s93, 1
      %s95 = scalar_select %p92, %s93, %s94
      %p98 = pneg %p92
      %p99 = scmp.eq.s32.totalorder %s15, 1
      %p100 = por %p98, %p99
      %p101 = scmp.ne.s32.totalorder %s93, %s96
      %p102 = scmp.eq.s32.totalorder %s15, 0
      %p103 = por %p101, %p102
      %p104 = scmp.ne.s32.totalorder %s93, %s96
      %p105 = scmp.eq.s32.totalorder %s20, 1
      %p106 = por %p104, %p105
      %p107 = scmp.ne.s32.totalorder %s96, %s97
      %p108 = scmp.eq.s32.totalorder %s20, 0
      %p109 = por %p107, %p108
      %p110 = scmp.ne.s32.totalorder %s96, %s97
      %p111 = scmp.eq.s32.totalorder %s21, 1
      %p112 = por %p110, %p111
      %p114 = scmp.ne.s32.totalorder %s97, %s113
      %p115 = scmp.eq.s32.totalorder %s21, 0
      %p116 = por %p114, %p115
      %p117 = scmp.le.s32.totalorder 1, %s15
      %p118 = scmp.lt.s32.totalorder %s15, 3
      %p119 = pnand %p117, %p118
      %p120 = pneg %p119
      // Predicated region
      $region9: #{tpu_custom_call.1} parent=5 // pred_check
        _
      $region10: #{tpu_custom_call.1} parent=5 // pred_check_branch
        %122 = sbr.rel (%p119) target = $region12
      $region11: #{tpu_custom_call.1} parent=5 // pred_region
        %s123 = ssub.s32 %s15, 1
        // Predicated region
        $region13: #{tpu_custom_call.1} parent=11 // pred_check
          %p124 = pneg %p62
        $region14: #{tpu_custom_call.1} parent=11 // pred_check_branch
          %126 = sbr.rel (%p124) target = $region16
        $region15: #{tpu_custom_call.1} parent=11 // pred_region
          _
        $region16: #{tpu_custom_call.1} parent=11 // pred_fallthru
          _
        // Predicated region
        $region17: #{tpu_custom_call.1} parent=11 // pred_check
          %p127 = pneg %p83
        $region18: #{tpu_custom_call.1} parent=11 // pred_check_branch
          %129 = sbr.rel (%p127) target = $region20
        $region19: #{tpu_custom_call.1} parent=11 // pred_region
          _
        $region20: #{tpu_custom_call.1} parent=11 // pred_fallthru
          _
      $region12: #{tpu_custom_call.1} parent=5 // pred_fallthru
        _
      %p130 = scmp.lt.s32.totalorder %s15, 2
      // Predicated region
      $region21: #{tpu_custom_call.1} parent=5 // pred_check
        %p131 = pneg %p130
      $region22: #{tpu_custom_call.1} parent=5 // pred_check_branch
        %133 = sbr.rel (%p131) target = $region24
      $region23: #{tpu_custom_call.1} parent=5 // pred_region
        // Predicated region
        $region25: #{tpu_custom_call.1} parent=23 // pred_check
          %p134 = pneg %p35
        $region26: #{tpu_custom_call.1} parent=23 // pred_check_branch
          %136 = sbr.rel (%p134) target = $region28
        $region27: #{tpu_custom_call.1} parent=23 // pred_region
          %s137 = sand.u32 %s25, 1
          %s138 = scalar_lea.sflag [#allocation3], %s137
          %s139 = sand.u32 %s25, 1
          %s140 = smul.addr %s139, 64
          %s141 = scalar_lea.vmem [#allocation2], %s140
          %s142 = smul.u32 2, %s15
          %s144 = ssub.s32 1024, 1024
          %145 = vsyncadd %s138, %s144
          %s146 = smul.addr %s142, 4
          %s147 = smul.addr %s146, 128
          %s148 = scalar_lea.hbm %s0, %s147
          %s149 = sshll.u32 %s141, 4
          %s150 = int_to_ptr.vmem [resolvable:$true] %s149
          %155 = dma.hbm_to_vmem [thread:$0]  %s148, 1024, %s150, %s138, 256, 256, 16
        $region28: #{tpu_custom_call.1} parent=23 // pred_fallthru
          _
      $region24: #{tpu_custom_call.1} parent=5 // pred_fallthru
        _
      %p156 = scmp.le.s32.totalorder 1, %s15
      %p157 = scmp.lt.s32.totalorder %s15, 3
      %p158 = pnand %p156, %p157
      %p159 = pneg %p158
      // Predicated region
      $region29: #{tpu_custom_call.1} parent=5 // pred_check
        _
      $region30: #{tpu_custom_call.1} parent=5 // pred_check_branch
        %161 = sbr.rel (%p158) target = $region32
      $region31: #{tpu_custom_call.1} parent=5 // pred_region
        %s162 = ssub.s32 %s15, 1
        %s163 = sand.u32 %s28, 1
        %s164 = scalar_lea.sflag [#allocation3], %s163
        %s165 = sand.u32 %s28, 1
        %s166 = smul.addr %s165, 64
        %s167 = scalar_lea.vmem [#allocation2], %s166
        // Predicated region
        $region33: #{tpu_custom_call.1} parent=31 // pred_check
          %p168 = pneg %p41
        $region34: #{tpu_custom_call.1} parent=31 // pred_check_branch
          %170 = sbr.rel (%p168) target = $region36
        $region35: #{tpu_custom_call.1} parent=31 // pred_region
          %171 = dma.done %s164, 1024
        $region36: #{tpu_custom_call.1} parent=31 // pred_fallthru
          _
        %s172 = sand.u32 %s28, 1
        %s173 = scalar_lea.sflag [#allocation3], %s172
        %s174 = sand.u32 %s28, 1
        %s175 = smul.addr %s174, 64
        %s176 = scalar_lea.vmem [#allocation2], %s175
        %p177 = pneg %p41
        %p178 = pneg %p38
        %p179 = pneg %p62
        %p180 = pneg %p59
        %p181 = pneg %p83
        %p182 = pneg %p80
        %p183 = pneg %p109
        %p184 = pneg %p106
        %s185 = sand.u32 %s96, 1
        %s186 = scalar_lea.sflag [#allocation4], %s185
        %s187 = sand.u32 %s96, 1
        %s188 = smul.addr %s187, 64
        %s189 = scalar_lea.vmem [#allocation5], %s188
        %s190 = smul.u32 2, %s20
        %s191 = smul.u32 2, %s20
        %v192 = vld [vmem:[%s167] sm:$0xff]
        %v193 = vld [vmem:[%s167 + $0x8] sm:$0xff]
        %v194 = vld [vmem:[%s167 + $0x10] sm:$0xff]
        %v195 = vld [vmem:[%s167 + $0x18] sm:$0xff]
        %v196 = vld [vmem:[%s167 + $0x20] sm:$0xff]
        %v197 = vld [vmem:[%s167 + $0x28] sm:$0xff]
        %v198 = vld [vmem:[%s167 + $0x30] sm:$0xff]
        %v199 = vld [vmem:[%s167 + $0x38] sm:$0xff]
        %v200 = vadd.f32 %v192, %v193
        %201 = vadd.xlane.f32.xlu0 %v200
        %v202 = vpop.xlane.xlu0 %201
        %v203 = vadd.f32 %v194, %v195
        %204 = vadd.xlane.f32.xlu0 %v203
        %v205 = vpop.xlane.xlu0 %204
        %v206 = vadd.f32 %v196, %v197
        %207 = vadd.xlane.f32.xlu0 %v206
        %v208 = vpop.xlane.xlu0 %207
        %v209 = vadd.f32 %v198, %v199
        %210 = vadd.xlane.f32.xlu0 %v209
        %v211 = vpop.xlane.xlu0 %210
        %v212 = vmul.f32 %v202, 0.00390625
        %v213 = vmul.f32 %v205, 0.00390625
        %v214 = vmul.f32 %v208, 0.00390625
        %v215 = vmul.f32 %v211, 0.00390625
        %v216 = vld [vmem:[%s1] sm:$0xff]
        %v217 = vld [vmem:[%s1 + $0x8] sm:$0xff]
        %v222 = vlaneseq
        %v223 = vand.u32 %v222, 127
        %v224 = vlaneseq
        %v225 = vshrl.u32 %v224, 7
        %v226 = vsub.s32 %v223, %v225
        %v227 = vrot.slane %v212, %v226
        %v228 = vadd.s32 %v223, 4294967288
        %v229 = vlaneseq
        %v230 = vshrl.u32 %v229, 7
        %v231 = vsub.s32 %v228, %v230
        %v232 = vrot.slane %v213, %v231
        %vm233 = vcmask 130112
        %v234 = vsel %vm233, %v232, %v227
        %v235 = vlaneseq
        %v236 = vshrl.u32 %v235, 7
        %v237 = vsub.s32 %v223, %v236
        %v238 = vrot.slane %v214, %v237
        %v239 = vlaneseq
        %v240 = vshrl.u32 %v239, 7
        %v241 = vsub.s32 %v228, %v240
        %v242 = vrot.slane %v215, %v241
        %v243 = vsel %vm233, %v242, %v238
        %vm244 = vcmask 1041409
        %v245 = vsel %vm244, %v243, %v234
        %vm246 = vcmask 130048
        %v247 = vsel %vm246, %v245, 0
        %249 = vmatprep.subr.mxu0 0.0
        %250 = vmatpush1.msra.mxu0 0.0
        %251 = vmatprep.subr.mxu0 0.0
        %252 = vmatpush1.msra.mxu0 0.0
        %253 = vmatprep.subr.mxu0 0.0
        %254 = vmatpush1.msra.mxu0 0.0
        %255 = vmatprep.subr.mxu0 0.0
        %256 = vmatpush1.msra.mxu0 0.0
        %257 = vmatprep.subr.mxu0 0.0
        %258 = vmatpush1.msra.mxu0 0.0
        %259 = vmatprep.subr.mxu0 0.0
        %260 = vmatpush1.msra.mxu0 0.0
        %261 = vmatprep.subr.mxu0 0.0
        %262 = vmatpush1.msra.mxu0 0.0
        %263 = vmatprep.subr.mxu0 0.0
        %264 = vmatpush1.msra.mxu0 0.0
        %265 = vmatprep.subr.mxu0 0.0
        %266 = vmatpush1.msra.mxu0 0.0
        %267 = vmatprep.subr.mxu0 0.0
        %268 = vmatpush1.msra.mxu0 0.0
        %269 = vmatprep.subr.mxu0 0.0
        %270 = vmatpush1.msra.mxu0 0.0
        %271 = vmatprep.subr.mxu0 0.0
        %272 = vmatpush1.msra.mxu0 0.0
        %273 = vmatprep.subr.mxu0 0.0
        %274 = vmatpush1.msra.mxu0 0.0
        %275 = vmatprep.subr.mxu0 0.0
        %276 = vmatpush1.msra.mxu0 0.0
        %277 = vmatprep.subr.mxu0 0.0
        %278 = vmatpush1.msra.mxu0 %v217
        %279 = vmatprep.subr.mxu0 0.0
        %280 = vmatpush1.msra.mxu0 %v216
        %281 = vmatprep.subr.mxu0 0.0
        %282 = vmatpush2.msra.mxu0 0.0
        %283 = vmatprep.subr.mxu0 0.0
        %284 = vmatpush2.msra.mxu0 0.0
        %285 = vmatprep.subr.mxu0 0.0
        %286 = vmatpush2.msra.mxu0 0.0
        %287 = vmatprep.subr.mxu0 0.0
        %288 = vmatpush2.msra.mxu0 0.0
        %289 = vmatprep.subr.mxu0 0.0
        %290 = vmatpush2.msra.mxu0 0.0
        %291 = vmatprep.subr.mxu0 0.0
        %292 = vmatpush2.msra.mxu0 0.0
        %293 = vmatprep.subr.mxu0 0.0
        %294 = vmatpush2.msra.mxu0 0.0
        %295 = vmatprep.subr.mxu0 0.0
        %296 = vmatpush2.msra.mxu0 0.0
        %297 = vmatprep.subr.mxu0 0.0
        %298 = vmatpush2.msra.mxu0 0.0
        %299 = vmatprep.subr.mxu0 0.0
        %300 = vmatpush2.msra.mxu0 0.0
        %301 = vmatprep.subr.mxu0 0.0
        %302 = vmatpush2.msra.mxu0 0.0
        %303 = vmatprep.subr.mxu0 0.0
        %304 = vmatpush2.msra.mxu0 0.0
        %305 = vmatprep.subr.mxu0 0.0
        %306 = vmatpush2.msra.mxu0 0.0
        %307 = vmatprep.subr.mxu0 0.0
        %308 = vmatpush2.msra.mxu0 0.0
        %309 = vmatprep.subr.mxu0 0.0
        %310 = vmatpush2.msra.mxu0 0.0
        %311 = vmatprep.subr.mxu0 0.0
        %312 = vmatpush2.msra.mxu0 0.0
        %313 = vmatprep.mubr.f32.mxu0 0.0
        %314 = vmatmul.mubr.f32.gmra.mxu0 %v247
        %v315 = vpop.f32.mrf.mxu0
        %v316 = vadd.f32 0.0, %v315
        %v317 = vpop.f32.mrf.mxu0
        %318 = vdwg.mxu0
        %v319 = vmax.f32 %v316, 0.0
        %v320 = vld [vmem:[%s2] sm:$0xf]
        %vm321 = vcmask 31744
        %v323 = vsel %vm321, %v319, 0
        %vm325 = vcmask 1043456
        %v327 = vsel %vm325, %v320, 0
        %329 = vmatprep.subr.mxu0 0.0
        %330 = vmatpush1.msra.mxu0 0.0
        %331 = vmatprep.subr.mxu0 0.0
        %332 = vmatpush1.msra.mxu0 0.0
        %333 = vmatprep.subr.mxu0 0.0
        %334 = vmatpush1.msra.mxu0 0.0
        %335 = vmatprep.subr.mxu0 0.0
        %336 = vmatpush1.msra.mxu0 0.0
        %337 = vmatprep.subr.mxu0 0.0
        %338 = vmatpush1.msra.mxu0 0.0
        %339 = vmatprep.subr.mxu0 0.0
        %340 = vmatpush1.msra.mxu0 0.0
        %341 = vmatprep.subr.mxu0 0.0
        %342 = vmatpush1.msra.mxu0 0.0
        %343 = vmatprep.subr.mxu0 0.0
        %344 = vmatpush1.msra.mxu0 0.0
        %345 = vmatprep.subr.mxu0 0.0
        %346 = vmatpush1.msra.mxu0 0.0
        %347 = vmatprep.subr.mxu0 0.0
        %348 = vmatpush1.msra.mxu0 0.0
        %349 = vmatprep.subr.mxu0 0.0
        %350 = vmatpush1.msra.mxu0 0.0
        %351 = vmatprep.subr.mxu0 0.0
        %352 = vmatpush1.msra.mxu0 0.0
        %353 = vmatprep.subr.mxu0 0.0
        %354 = vmatpush1.msra.mxu0 0.0
        %355 = vmatprep.subr.mxu0 0.0
        %356 = vmatpush1.msra.mxu0 0.0
        %357 = vmatprep.subr.mxu0 0.0
        %358 = vmatpush1.msra.mxu0 0.0
        %359 = vmatprep.subr.mxu0 0.0
        %360 = vmatpush1.msra.mxu0 %v327
        %361 = vmatprep.subr.mxu0 0.0
        %362 = vmatpush2.msra.mxu0 0.0
        %363 = vmatprep.subr.mxu0 0.0
        %364 = vmatpush2.msra.mxu0 0.0
        %365 = vmatprep.subr.mxu0 0.0
        %366 = vmatpush2.msra.mxu0 0.0
        %367 = vmatprep.subr.mxu0 0.0
        %368 = vmatpush2.msra.mxu0 0.0
        %369 = vmatprep.subr.mxu0 0.0
        %370 = vmatpush2.msra.mxu0 0.0
        %371 = vmatprep.subr.mxu0 0.0
        %372 = vmatpush2.msra.mxu0 0.0
        %373 = vmatprep.subr.mxu0 0.0
        %374 = vmatpush2.msra.mxu0 0.0
        %375 = vmatprep.subr.mxu0 0.0
        %376 = vmatpush2.msra.mxu0 0.0
        %377 = vmatprep.subr.mxu0 0.0
        %378 = vmatpush2.msra.mxu0 0.0
        %379 = vmatprep.subr.mxu0 0.0
        %380 = vmatpush2.msra.mxu0 0.0
        %381 = vmatprep.subr.mxu0 0.0
        %382 = vmatpush2.msra.mxu0 0.0
        %383 = vmatprep.subr.mxu0 0.0
        %384 = vmatpush2.msra.mxu0 0.0
        %385 = vmatprep.subr.mxu0 0.0
        %386 = vmatpush2.msra.mxu0 0.0
        %387 = vmatprep.subr.mxu0 0.0
        %388 = vmatpush2.msra.mxu0 0.0
        %389 = vmatprep.subr.mxu0 0.0
        %390 = vmatpush2.msra.mxu0 0.0
        %391 = vmatprep.subr.mxu0 0.0
        %392 = vmatpush2.msra.mxu0 0.0
        %393 = vmatprep.mubr.f32.mxu0 0.0
        %394 = vmatmul.mubr.f32.gmra.mxu0 %v323
        %v395 = vpop.f32.mrf.mxu0
        %v396 = vadd.f32 3.0, %v395
        %v397 = vpop.f32.mrf.mxu0
        %398 = vdwg.mxu0
        %v399 = vmax.f32 %v396, 0.0
        %v400 = vmin.f32 %v399, 6.0
        %v401 = vmul.f32 %v400, 0.16666667
        %v402 = vlaneseq
        %v403 = vshrl.u32 %v402, 7
        %v404 = vsub.s32 0, %v403
        %v405 = vrot.slane %v401, %v404
        %407 = vbcast.lane.b32.xlu0 %v405, 256
        %v408 = vpop.permute.xlu0 %407
        %s410 = sor.u32 256, 8
        %411 = vbcast.lane.b32.xlu0 %v405, %s410
        %v412 = vpop.permute.xlu0 %411
        %v413 = vlaneseq
        %v414 = vshrl.u32 %v413, 7
        %v415 = vsub.s32 1, %v414
        %v416 = vrot.slane %v401, %v415
        %418 = vbcast.lane.b32.xlu0 %v416, 256
        %v419 = vpop.permute.xlu0 %418
        %s421 = sor.u32 256, 8
        %422 = vbcast.lane.b32.xlu0 %v416, %s421
        %v423 = vpop.permute.xlu0 %422
        %v424 = vmul.f32 %v192, %v408
        %v425 = vmul.f32 %v193, %v408
        %v426 = vmul.f32 %v194, %v412
        %v427 = vmul.f32 %v195, %v412
        %v428 = vmul.f32 %v196, %v419
        %v429 = vmul.f32 %v197, %v419
        %v430 = vmul.f32 %v198, %v423
        %v431 = vmul.f32 %v199, %v423
        %432 = vst [vmem:[%s189] sm:$0xff] %v424
        %433 = vst [vmem:[%s189 + $0x8] sm:$0xff] %v425
        %434 = vst [vmem:[%s189 + $0x10] sm:$0xff] %v426
        %435 = vst [vmem:[%s189 + $0x18] sm:$0xff] %v427
        %436 = vst [vmem:[%s189 + $0x20] sm:$0xff] %v428
        %437 = vst [vmem:[%s189 + $0x28] sm:$0xff] %v429
        %438 = vst [vmem:[%s189 + $0x30] sm:$0xff] %v430
        %439 = vst [vmem:[%s189 + $0x38] sm:$0xff] %v431
        %s440 = sand.u32 %s96, 1
        %s441 = scalar_lea.sflag [#allocation4], %s440
        %s442 = sand.u32 %s96, 1
        %s443 = smul.addr %s442, 64
        %s444 = scalar_lea.vmem [#allocation5], %s443
        // Predicated region
        $region37: #{tpu_custom_call.1} parent=31 // pred_check
          %p445 = pneg %p106
        $region38: #{tpu_custom_call.1} parent=31 // pred_check_branch
          %447 = sbr.rel (%p445) target = $region40
        $region39: #{tpu_custom_call.1} parent=31 // pred_region
          %s448 = smul.u32 2, %s20
          %s450 = ssub.s32 1024, 1024
          %451 = vsyncadd %s441, %s450
          %s452 = smul.addr %s448, 4
          %s453 = smul.addr %s452, 128
          %s454 = scalar_lea.hbm %s3, %s453
          %s455 = sshll.u32 %s444, 4
          %s456 = int_to_ptr.vmem [resolvable:$true] %s455
          %461 = dma.vmem_to_hbm [thread:$0]  %s456, 1024, %s454, %s441, 256, 256, 16
        $region40: #{tpu_custom_call.1} parent=31 // pred_fallthru
          _
      $region32: #{tpu_custom_call.1} parent=5 // pred_fallthru
        _
      %p462 = scmp.le.s32.totalorder 2, %s15
      // Predicated region
      $region41: #{tpu_custom_call.1} parent=5 // pred_check
        %p463 = pneg %p462
      $region42: #{tpu_custom_call.1} parent=5 // pred_check_branch
        %465 = sbr.rel (%p463) target = $region44
      $region43: #{tpu_custom_call.1} parent=5 // pred_region
        %s466 = ssub.s32 %s15, 2
        // Predicated region
        $region45: #{tpu_custom_call.1} parent=43 // pred_check
          %p467 = pneg %p112
        $region46: #{tpu_custom_call.1} parent=43 // pred_check_branch
          %469 = sbr.rel (%p467) target = $region48
        $region47: #{tpu_custom_call.1} parent=43 // pred_region
          %s470 = sand.u32 %s97, 1
          %s471 = scalar_lea.sflag [#allocation4], %s470
          %s472 = sand.u32 %s97, 1
          %s473 = smul.addr %s472, 64
          %s474 = scalar_lea.vmem [#allocation5], %s473
          %475 = dma.done %s471, 1024
        $region48: #{tpu_custom_call.1} parent=43 // pred_fallthru
          _
      $region44: #{tpu_custom_call.1} parent=5 // pred_fallthru
        _
    $region6: #{tpu_custom_call.1} parent=1 // loop_footer
      %s19 = sadd.s32 1, %s15
    $region7: #{tpu_custom_call.1} parent=1 // loop_footer_branch
      %14 = sbr.rel target = $region3
    $region8: #{tpu_custom_call.1} parent=1 // loop_exit
      _
    %476 = vsyncpa [#allocation3], 1
    %s477 = scalar_lea.sflag [#allocation3], 1
    %478 = vsyncpa %s477, 1
    %479 = vsyncpa [#allocation4], 1
    %s480 = scalar_lea.sflag [#allocation4], 1
    %481 = vsyncpa %s480, 1

</llo_original>
